<compile_context>
chip_gen: v7x
topology: tpu7x:2x2x1
jax: 0.10.0
libtpu: 0.0.40
codegen_flags: <defaults>
</compile_context>

<pallas_src>
import functools
import numpy as np
import jax
import jax.numpy as jnp
from jax.experimental import pallas as pl
from jax.experimental.pallas import tpu as pltpu


_SUBLANE = 8    # f32 sublanes per vreg
_LANE = 128     # lanes per vreg


def _round_up(x, m):
    return ((x + m - 1) // m) * m


def _ola_kernel(x_ref, inv_ref, o_ref, acc_ref, *,
                frame_shift, frame_size_pad, frames_per_block, L_pad,
                clamp_padded_frames):
    """One grid step: accumulate `frames_per_block` frames of this batch tile
    into the resident f32 accumulator; normalize + store on the last step."""
    j = pl.program_id(1)

    @pl.when(j == 0)
    def _():
        acc_ref[...] = jnp.zeros_like(acc_ref)

    base = j * (frames_per_block * frame_shift)
    max_start = L_pad - frame_size_pad            # multiple of 128 by construction
    aligned = (frame_shift % _LANE == 0)

    # Static unrolled loop: static lane-aligned slices of the input slab,
    # dynamic-offset accumulate into the resident accumulator.
    for r in range(frames_per_block):
        start = base + r * frame_shift
        if clamp_padded_frames:
            # Padded tail frames are all-zero; clamping keeps the write in
            # bounds and the zero add is a semantic no-op.
            start = jnp.minimum(start, max_start)
        if aligned:
            start = pl.multiple_of(start, _LANE)
        frame = x_ref[:, r * frame_size_pad:(r + 1) * frame_size_pad]
        acc_ref[:, pl.ds(start, frame_size_pad)] += frame.astype(jnp.float32)

    @pl.when(j == pl.num_programs(1) - 1)
    def _():
        # Normalization folded into a precomputed f32 reciprocal vector; only
        # the final store casts back to the output dtype (v5e-safe f32 math).
        o_ref[...] = (acc_ref[...] * inv_ref[...]).astype(o_ref.dtype)


def _inv_overlap_counts(nframes, frame_size, frame_shift, L, L_pad):
    """1 / overlap-count per output sample, computed analytically in f32.

    count[l] = #{i : i*shift <= l < i*shift + frame_size, 0 <= i < nframes}.
    Only a (1, L_pad) vector -- no dense placement matrix is ever built.
    """
    l = jnp.arange(L_pad, dtype=jnp.int32)
    hi = jnp.minimum(l // frame_shift, nframes - 1)
    lo = jnp.maximum(-((-(l - frame_size + 1)) // frame_shift), 0)   # ceil-div
    count = (hi - lo + 1).astype(jnp.float32)
    count = jnp.where(l < L, count, 1.0)   # padded tail: avoid div-by-zero noise
    # NOTE: like the PyTorch reference, positions with zero overlap (only
    # possible when frame_shift > frame_size) produce non-finite values.
    return (1.0 / count).reshape(1, L_pad)


def torch_ola_pallas(inputs, frame_shift=256):
    """inputs: (..., nframes, frame_size) -> (..., (nframes-1)*frame_shift+frame_size)."""
    nframes = int(inputs.shape[-2])
    frame_size = int(inputs.shape[-1])
    lead = inputs.shape[:-2]
    B = int(np.prod(lead)) if lead else 1

    L = (nframes - 1) * frame_shift + frame_size
    frame_size_pad = _round_up(frame_size, _LANE)
    L_pad = _round_up((nframes - 1) * frame_shift + frame_size_pad, _LANE)

    itemsize = jnp.dtype(inputs.dtype).itemsize

    # --- Tile selection ---------------------------------------------------
    # VMEM use per batch tile: f32 accumulator + double-buffered output +
    # double-buffered input slab + the (tiny) reciprocal vector. Keep well
    # under the 32 MiB scoped limit we request (v7x physical VMEM is 64 MiB).
    budget = 24 * 1024 * 1024

    frames_per_block = max(1, min(8, nframes))
    b_tile = _round_up(min(B, 64), _SUBLANE)

    def _vmem_bytes(bt, fpb):
        acc = bt * L_pad * 4
        out = 2 * bt * L_pad * itemsize
        inp = 2 * bt * fpb * frame_size_pad * itemsize
        inv_v = 2 * L_pad * 4
        return acc + out + inp + inv_v

    while b_tile > _SUBLANE and _vmem_bytes(b_tile, frames_per_block) > budget:
        b_tile -= _SUBLANE
    while frames_per_block > 1 and _vmem_bytes(b_tile, frames_per_block) > budget:
        frames_per_block -= 1
    # TODO(synk): extremely long signals whose (b_tile, L_pad) f32 accumulator
    # cannot fit in VMEM would additionally need output-length tiling.

    B_pad = _round_up(B, b_tile)
    nframes_pad = _round_up(nframes, frames_per_block)

    # Layout plumbing (cheap, O(B*K)): pad frame_size to 128 lanes, pad batch
    # and frame axes, flatten frames so each grid step's input block is one
    # lane-aligned (b_tile, frames_per_block*frame_size_pad) slab.
    x = inputs.reshape(B, nframes, frame_size)
    x = jnp.pad(x, ((0, B_pad - B),
                    (0, nframes_pad - nframes),
                    (0, frame_size_pad - frame_size)))
    x2d = x.reshape(B_pad, nframes_pad * frame_size_pad)

    inv = _inv_overlap_counts(nframes, frame_size, frame_shift, L, L_pad)

    kernel = functools.partial(
        _ola_kernel,
        frame_shift=frame_shift,
        frame_size_pad=frame_size_pad,
        frames_per_block=frames_per_block,
        L_pad=L_pad,
        clamp_padded_frames=(nframes_pad != nframes),
    )

    out2d = pl.pallas_call(
        kernel,
        out_shape=jax.ShapeDtypeStruct((B_pad, L_pad), inputs.dtype),
        grid=(B_pad // b_tile, nframes_pad // frames_per_block),
        in_specs=[
            # slab of frames_per_block frames for batch tile b
            pl.BlockSpec((b_tile, frames_per_block * frame_size_pad),
                         lambda b, j: (b, j)),
            # reciprocal overlap counts (same block every step -> resident)
            pl.BlockSpec((1, L_pad), lambda b, j: (0, 0)),
        ],
        # output block constant over the frame axis -> resident accumulator target
        out_specs=pl.BlockSpec((b_tile, L_pad), lambda b, j: (b, 0)),
        scratch_shapes=[pltpu.VMEM((b_tile, L_pad), jnp.float32)],
        compiler_params=pltpu.CompilerParams(
            dimension_semantics=("parallel", "arbitrary"),
            vmem_limit_bytes=32 * 1024 * 1024,
        ),
    )(x2d, inv)

    return out2d[:B, :L].reshape(*lead, L)


def _reference_ola(inputs, frame_shift):
    # Direct NumPy re-implementation of the PyTorch forward for verification.
    inputs = np.asarray(inputs, dtype=np.float64)
    nframes = inputs.shape[-2]
    frame_size = inputs.shape[-1]
    sig_length = (nframes - 1) * frame_shift + frame_size
    sig = np.zeros(list(inputs.shape[:-2]) + [sig_length], dtype=np.float64)
    ones = np.zeros_like(sig)
    start, end = 0, frame_size
    for i in range(nframes):
        sig[..., start:end] += inputs[..., i, :]
        ones[..., start:end] += 1.0
        start = start + frame_shift
        end = start + frame_size
    return sig / ones


if __name__ == "__main__":
    key = jax.random.PRNGKey(0)

    # Small shapes consistent with the module: (batch, channels, nframes, frame_size)
    cases = [
        (2, 4, 8, 256, 128),   # 50% overlap, lane-aligned shift (small analogue of default 256)
        (2, 4, 5, 200, 96),    # unaligned frame size / shift
        (1, 2, 10, 256, 192),  # exercises frame-axis padding + clamped tail
    ]

    for idx, (batch, channels, nframes, frame_size, frame_shift) in enumerate(cases):
        key, sub = jax.random.split(key)
        x = jax.random.normal(sub, (batch, channels, nframes, frame_size),
                              dtype=jnp.float32)
        out = jax.block_until_ready(torch_ola_pallas(x, frame_shift=frame_shift))
        expected = _reference_ola(np.array(x), frame_shift)
        assert out.shape == expected.shape, (idx, out.shape, expected.shape)
        np.testing.assert_allclose(np.array(out), expected, rtol=1e-5, atol=1e-5)

    print("KERNEL_OK")
</pallas_src>

<mosaic_0001>
module attributes {stable_mosaic.version = 11 : i64} {
  func.func @_ola_kernel(%arg0: i32, %arg1: i32, %arg2: memref<8x2048xf32, #tpu.memory_space<vmem>>, %arg3: memref<1x1152xf32, #tpu.memory_space<vmem>>, %arg4: memref<8x1152xf32, #tpu.memory_space<vmem>>, %arg5: memref<8x1152xf32, #tpu.memory_space<vmem>>) attributes {dimension_semantics = [#tpu.dimension_semantics<parallel>, #tpu.dimension_semantics<arbitrary>], iteration_bounds = array<i64: 1, 1>, scalar_prefetch = 0 : i64, scratch_operands = 1 : i64, tpu.core_type = #tpu.core_type<tc>, window_params = [{transform_indices = @transform_0, window_bounds = array<i64: 8, 2048>}, {pipeline_mode = #tpu.pipeline_mode<synchronous>, transform_indices = @transform_1, window_bounds = array<i64: 1, 1152>}, {transform_indices = @transform_2, window_bounds = array<i64: 8, 1152>}]} {
    %c0_i32 = arith.constant 0 : i32
    %0 = arith.cmpi eq, %arg1, %c0_i32 : i32
    %1 = arith.extui %0 : i1 to i32
    %c0_i32_0 = arith.constant 0 : i32
    %2 = arith.cmpi ne, %1, %c0_i32_0 : i32
    scf.if %2 {
      %cst = arith.constant 0.000000e+00 : f32
      %71 = vector.broadcast %cst : f32 to vector<8x1152xf32>
      %c0_28 = arith.constant 0 : index
      %c0_29 = arith.constant 0 : index
      %72 = vector.load %arg5[%c0_28, %c0_29] : memref<8x1152xf32, #tpu.memory_space<vmem>>, vector<8x1152xf32>
      tpu.vector_store %arg5[%c0_28, %c0_29], %71 {strides = array<i32>} : memref<8x1152xf32, #tpu.memory_space<vmem>>, vector<8x1152xf32>,
    } else {
    }
    %c1024_i32 = arith.constant 1024 : i32
    %3 = arith.muli %arg1, %c1024_i32 : i32
    %c0_i32_1 = arith.constant 0 : i32
    %4 = arith.addi %3, %c0_i32_1 : i32
    %5 = tpu.assume_multiple %4, 128 : i32
    %c0 = arith.constant 0 : index
    %c0_2 = arith.constant 0 : index
    %6 = vector.load %arg2[%c0, %c0_2] : memref<8x2048xf32, #tpu.memory_space<vmem>>, vector<8x256xf32>
    %c0_3 = arith.constant 0 : index
    %7 = arith.index_cast %5 : i32 to index
    %8 = vector.load %arg5[%c0_3, %7] : memref<8x1152xf32, #tpu.memory_space<vmem>>, vector<8x256xf32>
    %9 = arith.addf %8, %6 : vector<8x256xf32>
    %c0_4 = arith.constant 0 : index
    %10 = arith.index_cast %5 : i32 to index
    %11 = vector.load %arg5[%c0_4, %10] : memref<8x1152xf32, #tpu.memory_space<vmem>>, vector<8x256xf32>
    tpu.vector_store %arg5[%c0_4, %10], %9 {strides = array<i32>} : memref<8x1152xf32, #tpu.memory_space<vmem>>, vector<8x256xf32>,
    %c128_i32 = arith.constant 128 : i32
    %12 = arith.addi %3, %c128_i32 : i32
    %13 = tpu.assume_multiple %12, 128 : i32
    %c0_5 = arith.constant 0 : index
    %c256 = arith.constant 256 : index
    %14 = vector.load %arg2[%c0_5, %c256] : memref<8x2048xf32, #tpu.memory_space<vmem>>, vector<8x256xf32>
    %c0_6 = arith.constant 0 : index
    %15 = arith.index_cast %13 : i32 to index
    %16 = vector.load %arg5[%c0_6, %15] : memref<8x1152xf32, #tpu.memory_space<vmem>>, vector<8x256xf32>
    %17 = arith.addf %16, %14 : vector<8x256xf32>
    %c0_7 = arith.constant 0 : index
    %18 = arith.index_cast %13 : i32 to index
    %19 = vector.load %arg5[%c0_7, %18] : memref<8x1152xf32, #tpu.memory_space<vmem>>, vector<8x256xf32>
    tpu.vector_store %arg5[%c0_7, %18], %17 {strides = array<i32>} : memref<8x1152xf32, #tpu.memory_space<vmem>>, vector<8x256xf32>,
    %c256_i32 = arith.constant 256 : i32
    %20 = arith.addi %3, %c256_i32 : i32
    %21 = tpu.assume_multiple %20, 128 : i32
    %c0_8 = arith.constant 0 : index
    %c512 = arith.constant 512 : index
    %22 = vector.load %arg2[%c0_8, %c512] : memref<8x2048xf32, #tpu.memory_space<vmem>>, vector<8x256xf32>
    %c0_9 = arith.constant 0 : index
    %23 = arith.index_cast %21 : i32 to index
    %24 = vector.load %arg5[%c0_9, %23] : memref<8x1152xf32, #tpu.memory_space<vmem>>, vector<8x256xf32>
    %25 = arith.addf %24, %22 : vector<8x256xf32>
    %c0_10 = arith.constant 0 : index
    %26 = arith.index_cast %21 : i32 to index
    %27 = vector.load %arg5[%c0_10, %26] : memref<8x1152xf32, #tpu.memory_space<vmem>>, vector<8x256xf32>
    tpu.vector_store %arg5[%c0_10, %26], %25 {strides = array<i32>} : memref<8x1152xf32, #tpu.memory_space<vmem>>, vector<8x256xf32>,
    %c384_i32 = arith.constant 384 : i32
    %28 = arith.addi %3, %c384_i32 : i32
    %29 = tpu.assume_multiple %28, 128 : i32
    %c0_11 = arith.constant 0 : index
    %c768 = arith.constant 768 : index
    %30 = vector.load %arg2[%c0_11, %c768] : memref<8x2048xf32, #tpu.memory_space<vmem>>, vector<8x256xf32>
    %c0_12 = arith.constant 0 : index
    %31 = arith.index_cast %29 : i32 to index
    %32 = vector.load %arg5[%c0_12, %31] : memref<8x1152xf32, #tpu.memory_space<vmem>>, vector<8x256xf32>
    %33 = arith.addf %32, %30 : vector<8x256xf32>
    %c0_13 = arith.constant 0 : index
    %34 = arith.index_cast %29 : i32 to index
    %35 = vector.load %arg5[%c0_13, %34] : memref<8x1152xf32, #tpu.memory_space<vmem>>, vector<8x256xf32>
    tpu.vector_store %arg5[%c0_13, %34], %33 {strides = array<i32>} : memref<8x1152xf32, #tpu.memory_space<vmem>>, vector<8x256xf32>,
    %c512_i32 = arith.constant 512 : i32
    %36 = arith.addi %3, %c512_i32 : i32
    %37 = tpu.assume_multiple %36, 128 : i32
    %c0_14 = arith.constant 0 : index
    %c1024 = arith.constant 1024 : index
    %38 = vector.load %arg2[%c0_14, %c1024] : memref<8x2048xf32, #tpu.memory_space<vmem>>, vector<8x256xf32>
    %c0_15 = arith.constant 0 : index
    %39 = arith.index_cast %37 : i32 to index
    %40 = vector.load %arg5[%c0_15, %39] : memref<8x1152xf32, #tpu.memory_space<vmem>>, vector<8x256xf32>
    %41 = arith.addf %40, %38 : vector<8x256xf32>
    %c0_16 = arith.constant 0 : index
    %42 = arith.index_cast %37 : i32 to index
    %43 = vector.load %arg5[%c0_16, %42] : memref<8x1152xf32, #tpu.memory_space<vmem>>, vector<8x256xf32>
    tpu.vector_store %arg5[%c0_16, %42], %41 {strides = array<i32>} : memref<8x1152xf32, #tpu.memory_space<vmem>>, vector<8x256xf32>,
    %c640_i32 = arith.constant 640 : i32
    %44 = arith.addi %3, %c640_i32 : i32
    %45 = tpu.assume_multiple %44, 128 : i32
    %c0_17 = arith.constant 0 : index
    %c1280 = arith.constant 1280 : index
    %46 = vector.load %arg2[%c0_17, %c1280] : memref<8x2048xf32, #tpu.memory_space<vmem>>, vector<8x256xf32>
    %c0_18 = arith.constant 0 : index
    %47 = arith.index_cast %45 : i32 to index
    %48 = vector.load %arg5[%c0_18, %47] : memref<8x1152xf32, #tpu.memory_space<vmem>>, vector<8x256xf32>
    %49 = arith.addf %48, %46 : vector<8x256xf32>
    %c0_19 = arith.constant 0 : index
    %50 = arith.index_cast %45 : i32 to index
    %51 = vector.load %arg5[%c0_19, %50] : memref<8x1152xf32, #tpu.memory_space<vmem>>, vector<8x256xf32>
    tpu.vector_store %arg5[%c0_19, %50], %49 {strides = array<i32>} : memref<8x1152xf32, #tpu.memory_space<vmem>>, vector<8x256xf32>,
    %c768_i32 = arith.constant 768 : i32
    %52 = arith.addi %3, %c768_i32 : i32
    %53 = tpu.assume_multiple %52, 128 : i32
    %c0_20 = arith.constant 0 : index
    %c1536 = arith.constant 1536 : index
    %54 = vector.load %arg2[%c0_20, %c1536] : memref<8x2048xf32, #tpu.memory_space<vmem>>, vector<8x256xf32>
    %c0_21 = arith.constant 0 : index
    %55 = arith.index_cast %53 : i32 to index
    %56 = vector.load %arg5[%c0_21, %55] : memref<8x1152xf32, #tpu.memory_space<vmem>>, vector<8x256xf32>
    %57 = arith.addf %56, %54 : vector<8x256xf32>
    %c0_22 = arith.constant 0 : index
    %58 = arith.index_cast %53 : i32 to index
    %59 = vector.load %arg5[%c0_22, %58] : memref<8x1152xf32, #tpu.memory_space<vmem>>, vector<8x256xf32>
    tpu.vector_store %arg5[%c0_22, %58], %57 {strides = array<i32>} : memref<8x1152xf32, #tpu.memory_space<vmem>>, vector<8x256xf32>,
    %c896_i32 = arith.constant 896 : i32
    %60 = arith.addi %3, %c896_i32 : i32
    %61 = tpu.assume_multiple %60, 128 : i32
    %c0_23 = arith.constant 0 : index
    %c1792 = arith.constant 1792 : index
    %62 = vector.load %arg2[%c0_23, %c1792] : memref<8x2048xf32, #tpu.memory_space<vmem>>, vector<8x256xf32>
    %c0_24 = arith.constant 0 : index
    %63 = arith.index_cast %61 : i32 to index
    %64 = vector.load %arg5[%c0_24, %63] : memref<8x1152xf32, #tpu.memory_space<vmem>>, vector<8x256xf32>
    %65 = arith.addf %64, %62 : vector<8x256xf32>
    %c0_25 = arith.constant 0 : index
    %66 = arith.index_cast %61 : i32 to index
    %67 = vector.load %arg5[%c0_25, %66] : memref<8x1152xf32, #tpu.memory_space<vmem>>, vector<8x256xf32>
    tpu.vector_store %arg5[%c0_25, %66], %65 {strides = array<i32>} : memref<8x1152xf32, #tpu.memory_space<vmem>>, vector<8x256xf32>,
    %c0_i32_26 = arith.constant 0 : i32
    %68 = arith.cmpi eq, %arg1, %c0_i32_26 : i32
    %69 = arith.extui %68 : i1 to i32
    %c0_i32_27 = arith.constant 0 : i32
    %70 = arith.cmpi ne, %69, %c0_i32_27 : i32
    scf.if %70 {
      %c0_28 = arith.constant 0 : index
      %c0_29 = arith.constant 0 : index
      %71 = vector.load %arg5[%c0_28, %c0_29] : memref<8x1152xf32, #tpu.memory_space<vmem>>, vector<8x1152xf32>
      %c0_30 = arith.constant 0 : index
      %c0_31 = arith.constant 0 : index
      %72 = vector.load %arg3[%c0_30, %c0_31] : memref<1x1152xf32, #tpu.memory_space<vmem>>, vector<1x1152xf32>
      %73 = vector.broadcast %72 : vector<1x1152xf32> to vector<8x1152xf32>
      %74 = arith.mulf %71, %73 : vector<8x1152xf32>
      %c0_32 = arith.constant 0 : index
      %c0_33 = arith.constant 0 : index
      %75 = vector.load %arg4[%c0_32, %c0_33] : memref<8x1152xf32, #tpu.memory_space<vmem>>, vector<8x1152xf32>
      tpu.vector_store %arg4[%c0_32, %c0_33], %74 {strides = array<i32>} : memref<8x1152xf32, #tpu.memory_space<vmem>>, vector<8x1152xf32>,
    } else {
    }
    return
  }
  func.func @transform_0(%arg0: i32, %arg1: i32) -> (i32, i32) {
    %c0_i32 = arith.constant 0 : i32
    return %arg0, %arg1 : i32, i32
  }
  func.func @transform_1(%arg0: i32, %arg1: i32) -> (i32, i32) {
    %c0_i32 = arith.constant 0 : i32
    %c0_i32_0 = arith.constant 0 : i32
    %c0_i32_1 = arith.constant 0 : i32
    return %c0_i32, %c0_i32_0 : i32, i32
  }
  func.func @transform_2(%arg0: i32, %arg1: i32) -> (i32, i32) {
    %c0_i32 = arith.constant 0 : i32
    %c0_i32_0 = arith.constant 0 : i32
    return %arg0, %c0_i32 : i32, i32
  }
}

</mosaic_0001>

<llo_original>
// kernel: tpu_custom_call.1
$region0: #{tpu_custom_call.1}
  #allocation0 [shape = 'u32[]', space=smem, size = 0x4, offset = 0x4, fixed_abs, tag = 'smem constant byte address 0x4 - core index']
  #allocation1 [shape = 'u32[144,128]{1,0:T(1,128)}', space=vmem, size = 0x12000, scoped, tag = 'internal scratch']
  #allocation2 [shape = 'f32[8,1152]{1,0:T(8,128)}', space=vmem, size = 0x9000, scoped, tag = 'scratch operand']
  %s0 = inlined_call_operand.hbm [shape: f32[8,2048], index: 0, kind: input, shape index: {}]
  %s1 = inlined_call_operand.hbm [shape: f32[1,1152], index: 1, kind: input, shape index: {}]
  %s2 = inlined_call_operand.hbm [shape: f32[8,1152], index: 2, kind: output, shape index: {}]
  %s3 = sld [smem:[#allocation0]]
  $region34: #{tpu_custom_call.1} parent=0
    _
  %s5 = ssub.s32 1, %s3
  %s6 = scalar_select 0, %s5, %s3
  $region1: #{tpu_custom_call.1} parent=0
    #allocation3 [shape = 'u8[65536]{0}', space=vmem, size = 0x10000, scoped, tag = 'input window, operand 0, single buffered']
    #allocation4 [shape = 's32[1]{0}', space=sflag, size = 0x4, scoped, tag = 'scoped memory for tpu_custom_call.1']
    #allocation5 [shape = 's32[1]{0}', space=sflag, size = 0x4, scoped, tag = 'scoped memory for tpu_custom_call.1']
    #allocation6 [shape = 'u8[4608]{0}', space=vmem, size = 0x1400, scoped, tag = 'input window, operand 1, single buffered']
    #allocation7 [shape = 's32[1]{0}', space=sflag, size = 0x4, scoped, tag = 'scoped memory for tpu_custom_call.1']
    #allocation8 [shape = 'u8[36864]{0}', space=vmem, size = 0x9000, scoped, tag = 'output window, operand 0, single buffered']
    %7 = vsyncpa [#allocation4], 0
    %8 = vsyncpa [#allocation7], 0
    %9 = vsyncpa [#allocation5], 0
    // Predicated region
    $region2: #{tpu_custom_call.1} parent=1 // pred_check
      _
    $region3: #{tpu_custom_call.1} parent=1 // pred_check_branch
      %11 = sbr.rel (0) target = $region5
    $region4: #{tpu_custom_call.1} parent=1 // pred_region
      %s13 = ssub.s32 2048, 2048
      %14 = vsyncadd [#allocation4], %s13
      %s16 = sshll.u32 [#allocation3], 4
      %s17 = int_to_ptr.vmem [resolvable:$true] %s16
      %19 = dma.hbm_to_vmem [thread:$0]  %s0, 2048, %s17, [#allocation4]
    $region5: #{tpu_custom_call.1} parent=1 // pred_fallthru
      _
    // Predicated region
    $region6: #{tpu_custom_call.1} parent=1 // pred_check
      _
    $region7: #{tpu_custom_call.1} parent=1 // pred_check_branch
      %21 = sbr.rel (0) target = $region9
    $region8: #{tpu_custom_call.1} parent=1 // pred_region
      %s23 = ssub.s32 144, 144
      %24 = vsyncadd [#allocation7], %s23
      %s26 = sshll.u32 [#allocation6], 4
      %s27 = int_to_ptr.vmem [resolvable:$true] %s26
      %29 = dma.hbm_to_vmem [thread:$0]  %s1, 144, %s27, [#allocation7]
    $region9: #{tpu_custom_call.1} parent=1 // pred_fallthru
      _
    // Predicated region
    $region10: #{tpu_custom_call.1} parent=1 // pred_check
      _
    $region11: #{tpu_custom_call.1} parent=1 // pred_check_branch
      %31 = sbr.rel (0) target = $region13
    $region12: #{tpu_custom_call.1} parent=1 // pred_region
      %32 = dma.done [#allocation4], 2048
    $region13: #{tpu_custom_call.1} parent=1 // pred_fallthru
      _
    // Predicated region
    $region14: #{tpu_custom_call.1} parent=1 // pred_check
      _
    $region15: #{tpu_custom_call.1} parent=1 // pred_check_branch
      %34 = sbr.rel (0) target = $region17
    $region16: #{tpu_custom_call.1} parent=1 // pred_region
      %35 = dma.done [#allocation7], 144
    $region17: #{tpu_custom_call.1} parent=1 // pred_fallthru
      _
    %p36 = scmp.eq.s32.totalorder 0, 0
    // Predicated region
    $region18: #{tpu_custom_call.1} parent=1 // pred_check
      %p37 = pneg %p36
    $region19: #{tpu_custom_call.1} parent=1 // pred_check_branch
      %39 = sbr.rel (%p37) target = $region21
    $region20: #{tpu_custom_call.1} parent=1 // pred_region
      %40 = vst [vmem:[#allocation2] sm:$0xff] 0.0
      %41 = vst [vmem:[#allocation2 + $0x8] sm:$0xff] 0.0
      %42 = vst [vmem:[#allocation2 + $0x10] sm:$0xff] 0.0
      %43 = vst [vmem:[#allocation2 + $0x18] sm:$0xff] 0.0
      %44 = vst [vmem:[#allocation2 + $0x20] sm:$0xff] 0.0
      %45 = vst [vmem:[#allocation2 + $0x28] sm:$0xff] 0.0
      %46 = vst [vmem:[#allocation2 + $0x30] sm:$0xff] 0.0
      %47 = vst [vmem:[#allocation2 + $0x38] sm:$0xff] 0.0
      %48 = vst [vmem:[#allocation2 + $0x40] sm:$0xff] 0.0
    $region21: #{tpu_custom_call.1} parent=1 // pred_fallthru
      _
    %s49 = smul.u32 0, 1024
    %v50 = vld [vmem:[#allocation3] sm:$0xff]
    %v51 = vld [vmem:[#allocation3 + $0x8] sm:$0xff]
    %s52 = sshra.s32 %s49, 7
    %s53 = sand.u32 %s49, 127
    %s54 = smul.addr %s52, 8
    %s55 = scalar_lea.vmem [#allocation2], %s54
    %v56 = vld [vmem:[%s55] sm:$0xff]
    %v57 = vld [vmem:[%s55 + $0x8] sm:$0xff]
    %v58 = vadd.f32 %v56, %v50
    %v59 = vadd.f32 %v57, %v51
    %60 = vst [vmem:[%s55] sm:$0xff] %v58
    %61 = vst [vmem:[%s55 + $0x8] sm:$0xff] %v59
    %s62 = sadd.s32 %s49, 128
    %v63 = vld [vmem:[#allocation3 + $0x10] sm:$0xff]
    %v64 = vld [vmem:[#allocation3 + $0x18] sm:$0xff]
    %s65 = sshra.s32 %s62, 7
    %s66 = sand.u32 %s62, 127
    %s67 = smul.addr %s65, 8
    %s68 = scalar_lea.vmem [#allocation2], %s67
    %v69 = vld [vmem:[%s68] sm:$0xff]
    %v70 = vld [vmem:[%s68 + $0x8] sm:$0xff]
    %v71 = vadd.f32 %v69, %v63
    %v72 = vadd.f32 %v70, %v64
    %73 = vst [vmem:[%s68] sm:$0xff] %v71
    %74 = vst [vmem:[%s68 + $0x8] sm:$0xff] %v72
    %s75 = sadd.s32 %s49, 256
    %v76 = vld [vmem:[#allocation3 + $0x20] sm:$0xff]
    %v77 = vld [vmem:[#allocation3 + $0x28] sm:$0xff]
    %s78 = sshra.s32 %s75, 7
    %s79 = sand.u32 %s75, 127
    %s80 = smul.addr %s78, 8
    %s81 = scalar_lea.vmem [#allocation2], %s80
    %v82 = vld [vmem:[%s81] sm:$0xff]
    %v83 = vld [vmem:[%s81 + $0x8] sm:$0xff]
    %v84 = vadd.f32 %v82, %v76
    %v85 = vadd.f32 %v83, %v77
    %86 = vst [vmem:[%s81] sm:$0xff] %v84
    %87 = vst [vmem:[%s81 + $0x8] sm:$0xff] %v85
    %s88 = sadd.s32 %s49, 384
    %v89 = vld [vmem:[#allocation3 + $0x30] sm:$0xff]
    %v90 = vld [vmem:[#allocation3 + $0x38] sm:$0xff]
    %s91 = sshra.s32 %s88, 7
    %s92 = sand.u32 %s88, 127
    %s93 = smul.addr %s91, 8
    %s94 = scalar_lea.vmem [#allocation2], %s93
    %v95 = vld [vmem:[%s94] sm:$0xff]
    %v96 = vld [vmem:[%s94 + $0x8] sm:$0xff]
    %v97 = vadd.f32 %v95, %v89
    %v98 = vadd.f32 %v96, %v90
    %99 = vst [vmem:[%s94] sm:$0xff] %v97
    %100 = vst [vmem:[%s94 + $0x8] sm:$0xff] %v98
    %s101 = sadd.s32 %s49, 512
    %v102 = vld [vmem:[#allocation3 + $0x40] sm:$0xff]
    %v103 = vld [vmem:[#allocation3 + $0x48] sm:$0xff]
    %s104 = sshra.s32 %s101, 7
    %s105 = sand.u32 %s101, 127
    %s106 = smul.addr %s104, 8
    %s107 = scalar_lea.vmem [#allocation2], %s106
    %v108 = vld [vmem:[%s107] sm:$0xff]
    %v109 = vld [vmem:[%s107 + $0x8] sm:$0xff]
    %v110 = vadd.f32 %v108, %v102
    %v111 = vadd.f32 %v109, %v103
    %112 = vst [vmem:[%s107] sm:$0xff] %v110
    %113 = vst [vmem:[%s107 + $0x8] sm:$0xff] %v111
    %s114 = sadd.s32 %s49, 640
    %v115 = vld [vmem:[#allocation3 + $0x50] sm:$0xff]
    %v116 = vld [vmem:[#allocation3 + $0x58] sm:$0xff]
    %s117 = sshra.s32 %s114, 7
    %s118 = sand.u32 %s114, 127
    %s119 = smul.addr %s117, 8
    %s120 = scalar_lea.vmem [#allocation2], %s119
    %v121 = vld [vmem:[%s120] sm:$0xff]
    %v122 = vld [vmem:[%s120 + $0x8] sm:$0xff]
    %v123 = vadd.f32 %v121, %v115
    %v124 = vadd.f32 %v122, %v116
    %125 = vst [vmem:[%s120] sm:$0xff] %v123
    %126 = vst [vmem:[%s120 + $0x8] sm:$0xff] %v124
    %s127 = sadd.s32 %s49, 768
    %v128 = vld [vmem:[#allocation3 + $0x60] sm:$0xff]
    %v129 = vld [vmem:[#allocation3 + $0x68] sm:$0xff]
    %s130 = sshra.s32 %s127, 7
    %s131 = sand.u32 %s127, 127
    %s132 = smul.addr %s130, 8
    %s133 = scalar_lea.vmem [#allocation2], %s132
    %v134 = vld [vmem:[%s133] sm:$0xff]
    %v135 = vld [vmem:[%s133 + $0x8] sm:$0xff]
    %v136 = vadd.f32 %v134, %v128
    %v137 = vadd.f32 %v135, %v129
    %138 = vst [vmem:[%s133] sm:$0xff] %v136
    %139 = vst [vmem:[%s133 + $0x8] sm:$0xff] %v137
    %s140 = sadd.s32 %s49, 896
    %v141 = vld [vmem:[#allocation3 + $0x70] sm:$0xff]
    %v142 = vld [vmem:[#allocation3 + $0x78] sm:$0xff]
    %s143 = sshra.s32 %s140, 7
    %s144 = sand.u32 %s140, 127
    %s145 = smul.addr %s143, 8
    %s146 = scalar_lea.vmem [#allocation2], %s145
    %v147 = vld [vmem:[%s146] sm:$0xff]
    %v148 = vld [vmem:[%s146 + $0x8] sm:$0xff]
    %v149 = vadd.f32 %v147, %v141
    %v150 = vadd.f32 %v148, %v142
    %151 = vst [vmem:[%s146] sm:$0xff] %v149
    %152 = vst [vmem:[%s146 + $0x8] sm:$0xff] %v150
    // Predicated region
    $region22: #{tpu_custom_call.1} parent=1 // pred_check
      %p153 = pneg %p36
    $region23: #{tpu_custom_call.1} parent=1 // pred_check_branch
      %155 = sbr.rel (%p153) target = $region25
    $region24: #{tpu_custom_call.1} parent=1 // pred_region
      %v156 = vld [vmem:[#allocation2] sm:$0xff]
      %v157 = vld [vmem:[#allocation2 + $0x8] sm:$0xff]
      %v158 = vld [vmem:[#allocation2 + $0x10] sm:$0xff]
      %v159 = vld [vmem:[#allocation2 + $0x18] sm:$0xff]
      %v160 = vld [vmem:[#allocation2 + $0x20] sm:$0xff]
      %v161 = vld [vmem:[#allocation2 + $0x28] sm:$0xff]
      %v162 = vld [vmem:[#allocation2 + $0x30] sm:$0xff]
      %v163 = vld [vmem:[#allocation2 + $0x38] sm:$0xff]
      %v164 = vld [vmem:[#allocation2 + $0x40] sm:$0xff]
      %v165 = vld [vmem:[#allocation6] sm:$0xff]
      %v166 = vld [vmem:[#allocation6 + $0x8] sm:$0x1]
      %v169 = vlaneseq
      %v170 = vshrl.u32 %v169, 7
      %v171 = vsub.s32 0, %v170
      %v172 = vrot.slane %v165, %v171
      %v173 = vlaneseq
      %v174 = vshrl.u32 %v173, 7
      %v175 = vsub.s32 1, %v174
      %v176 = vrot.slane %v165, %v175
      %v177 = vlaneseq
      %v178 = vshrl.u32 %v177, 7
      %v179 = vsub.s32 2, %v178
      %v180 = vrot.slane %v165, %v179
      %v181 = vlaneseq
      %v182 = vshrl.u32 %v181, 7
      %v183 = vsub.s32 3, %v182
      %v184 = vrot.slane %v165, %v183
      %v185 = vlaneseq
      %v186 = vshrl.u32 %v185, 7
      %v187 = vsub.s32 4, %v186
      %v188 = vrot.slane %v165, %v187
      %v189 = vlaneseq
      %v190 = vshrl.u32 %v189, 7
      %v191 = vsub.s32 5, %v190
      %v192 = vrot.slane %v165, %v191
      %v193 = vlaneseq
      %v194 = vshrl.u32 %v193, 7
      %v195 = vsub.s32 6, %v194
      %v196 = vrot.slane %v165, %v195
      %v197 = vlaneseq
      %v198 = vshrl.u32 %v197, 7
      %v199 = vsub.s32 7, %v198
      %v200 = vrot.slane %v165, %v199
      %v201 = vlaneseq
      %v202 = vshrl.u32 %v201, 7
      %v203 = vsub.s32 0, %v202
      %v204 = vrot.slane %v166, %v203
      %v214 = vmul.f32 %v156, %v172
      %v215 = vmul.f32 %v157, %v176
      %v216 = vmul.f32 %v158, %v180
      %v217 = vmul.f32 %v159, %v184
      %v218 = vmul.f32 %v160, %v188
      %v219 = vmul.f32 %v161, %v192
      %v220 = vmul.f32 %v162, %v196
      %v221 = vmul.f32 %v163, %v200
      %v222 = vmul.f32 %v164, %v204
      %223 = vst [vmem:[#allocation8] sm:$0xff] %v214
      %224 = vst [vmem:[#allocation8 + $0x8] sm:$0xff] %v215
      %225 = vst [vmem:[#allocation8 + $0x10] sm:$0xff] %v216
      %226 = vst [vmem:[#allocation8 + $0x18] sm:$0xff] %v217
      %227 = vst [vmem:[#allocation8 + $0x20] sm:$0xff] %v218
      %228 = vst [vmem:[#allocation8 + $0x28] sm:$0xff] %v219
      %229 = vst [vmem:[#allocation8 + $0x30] sm:$0xff] %v220
      %230 = vst [vmem:[#allocation8 + $0x38] sm:$0xff] %v221
      %231 = vst [vmem:[#allocation8 + $0x40] sm:$0xff] %v222
    $region25: #{tpu_custom_call.1} parent=1 // pred_fallthru
      _
    // Predicated region
    $region26: #{tpu_custom_call.1} parent=1 // pred_check
      _
    $region27: #{tpu_custom_call.1} parent=1 // pred_check_branch
      %233 = sbr.rel (0) target = $region29
    $region28: #{tpu_custom_call.1} parent=1 // pred_region
      %s235 = ssub.s32 1152, 1152
      %236 = vsyncadd [#allocation5], %s235
      %s238 = sshll.u32 [#allocation8], 4
      %s239 = int_to_ptr.vmem [resolvable:$true] %s238
      %241 = dma.vmem_to_hbm [thread:$0]  %s239, 1152, %s2, [#allocation5]
    $region29: #{tpu_custom_call.1} parent=1 // pred_fallthru
      _
    // Predicated region
    $region30: #{tpu_custom_call.1} parent=1 // pred_check
      _
    $region31: #{tpu_custom_call.1} parent=1 // pred_check_branch
      %243 = sbr.rel (0) target = $region33
    $region32: #{tpu_custom_call.1} parent=1 // pred_region
      %244 = dma.done [#allocation5], 1152
    $region33: #{tpu_custom_call.1} parent=1 // pred_fallthru
      _
    %245 = vsyncpa [#allocation4], 1
    %246 = vsyncpa [#allocation7], 1
    %247 = vsyncpa [#allocation5], 1

</llo_original>
